<compile_context>
chip_gen: v5e
topology: v5e:2x2
jax: 0.10.0
libtpu: 0.0.40
codegen_flags: <defaults>
</compile_context>

<pallas_src>
import jax
import jax.numpy as jnp
from jax import lax
from jax.experimental import pallas as pl
from jax.experimental.pallas import tpu as pltpu


# ----------------------------------------------------------------------------
# helpers
# ----------------------------------------------------------------------------
def _largest_divisor(n, cap, multiple_of=1):
    """Largest d with n % d == 0, d <= cap, d % multiple_of == 0 (fallback 1 / n)."""
    cap = max(1, min(int(cap), n))
    for d in range(cap, 0, -1):
        if n % d == 0 and d % multiple_of == 0:
            return d
    return n if multiple_of > 1 else 1


def _num_tensorcores_per_chip():
    """2 on v7x (megacore sharding is worth forcing >=2 grid steps), else 1."""
    try:
        kind = jax.devices()[0].device_kind.lower()
        if "v7" in kind:
            return 2
    except Exception:  # pragma: no cover - defensive; default is always safe
        pass
    return 1


# ----------------------------------------------------------------------------
# kernel
# ----------------------------------------------------------------------------
def fbank_aug_kernel(params_ref, x_ref, o_ref):
    """params_ref: (4*B,) int32 in SMEM, per-batch [t_pos, t_len, f_pos, f_len].
    x_ref / o_ref: (b_blk, f_blk, T) VMEM tiles for the current (batch, freq) block."""
    b_blk, f_blk, t_dim = x_ref.shape
    base = pl.program_id(0) * b_blk          # first batch element of this block
    f_start = pl.program_id(1) * f_blk       # freq offset of this block

    # index vectors, hoisted out of the per-batch loop (broadcast only in select)
    t_idx = lax.broadcasted_iota(jnp.int32, (1, t_dim), 1)             # (1, T)
    f_idx = lax.broadcasted_iota(jnp.int32, (f_blk, 1), 0) + f_start   # (f_blk, 1)

    zero = jnp.zeros((), dtype=o_ref.dtype)

    def body(bl, carry):
        p = (base + bl) * 4
        t_pos = params_ref[p + 0]
        t_len = params_ref[p + 1]
        f_pos = params_ref[p + 2]
        f_len = params_ref[p + 3]

        time_mask = (t_idx >= t_pos) & (t_idx < t_pos + t_len)   # (1, T)
        freq_mask = (f_idx >= f_pos) & (f_idx < f_pos + f_len)   # (f_blk, 1)
        mask = time_mask | freq_mask                             # (f_blk, T)

        o_ref[bl] = jnp.where(mask, zero, x_ref[bl])
        return carry

    lax.fori_loop(0, b_blk, body, 0, unroll=(b_blk <= 8))


# ----------------------------------------------------------------------------
# wrapper
# ----------------------------------------------------------------------------
def fbank_aug_pallas(x, params, *, target_tile_bytes=6 * 1024 * 1024, max_b_blk=64):
    """x: (B, F, T); params: (B, 4) int32 = [t_pos, t_len, f_pos, f_len]."""
    B, F, T = x.shape
    itemsize = jnp.dtype(x.dtype).itemsize
    per_elem = F * T * itemsize

    # --- freq block: full F normally; tile F (multiples of 8) only when one
    #     batch element is bigger than the tile budget -------------------------
    if per_elem <= target_tile_bytes or F % 8 != 0 or F <= 8:
        f_blk = F                                   # full-dim block -> (8,128) rule waived
    else:
        rows_cap = max(8, ((target_tile_bytes // (T * itemsize)) // 8) * 8)
        f_blk = _largest_divisor(F, rows_cap, multiple_of=8)
    grid_f = F // f_blk

    # --- batch block: largest divisor of B within the byte budget -------------
    tile_elem_bytes = f_blk * T * itemsize
    b_cap = max(1, min(target_tile_bytes // tile_elem_bytes, max_b_blk))
    b_blk = _largest_divisor(B, b_cap)
    if _num_tensorcores_per_chip() >= 2 and grid_f == 1 and B > 1 and b_blk == B:
        # v7x: keep >= 2 grid steps so both TensorCores share the batch axis
        b_blk = _largest_divisor(B, max(1, B // 2))
    grid_b = B // b_blk

    # --- VMEM budget: (in + out) x double-buffer = 4x tile ---------------------
    tile_bytes = b_blk * f_blk * T * itemsize
    vmem_limit = int(min(max(4 * tile_bytes + (2 << 20), 16 << 20), 48 << 20))
    # TODO(synk): if a single (1, F, T) tile ever exceeds ~12 MiB with F % 8 != 0
    # (no F-tiling possible), also tile T in multiples of 128.

    params_flat = params.reshape(-1).astype(jnp.int32)   # (4*B,) -> SMEM (1-D, no pad blowup)

    cost = pl.CostEstimate(
        flops=0, transcendentals=0,
        bytes_accessed=2 * B * F * T * itemsize)

    return pl.pallas_call(
        fbank_aug_kernel,
        out_shape=jax.ShapeDtypeStruct((B, F, T), x.dtype),
        grid_spec=pltpu.PrefetchScalarGridSpec(
            num_scalar_prefetch=1,                       # params -> SMEM
            grid=(grid_b, grid_f),
            in_specs=[pl.BlockSpec((b_blk, f_blk, T), lambda i, j, p: (i, j, 0))],
            out_specs=pl.BlockSpec((b_blk, f_blk, T), lambda i, j, p: (i, j, 0)),
        ),
        compiler_params=pltpu.CompilerParams(
            dimension_semantics=("parallel", "parallel"),
            vmem_limit_bytes=vmem_limit),
        cost_estimate=cost,
    )(params_flat, x)


# ----------------------------------------------------------------------------
# mask-parameter sampling (forward() semantics: time mask then freq mask)
# ----------------------------------------------------------------------------
def sample_mask_params(key, batch, D, width_range):
    """Reproduce torch.randint semantics of FbankAug.mask_along_axis."""
    k_len, k_pos = jax.random.split(key)
    low, high = width_range
    mask_len = jax.random.randint(k_len, (batch,), low, high, dtype=jnp.int32)
    # torch: randint(0, max(1, D - mask_len.max())) -- shared upper bound per call.
    # (fixed-range draw + mod keeps shapes static; tiny modulo bias is acceptable
    #  for augmentation and not bit-identical to torch anyway)
    pos_high = jnp.maximum(1, D - jnp.max(mask_len))
    mask_pos = jax.random.randint(k_pos, (batch,), 0, 2**30, dtype=jnp.int32) % pos_high
    return mask_pos, mask_len


def fbank_aug(x, key, freq_mask_width=(0, 8), time_mask_width=(0, 10)):
    B, F, T = x.shape
    k_t, k_f = jax.random.split(key)
    # forward(): time mask first (dim=2), then freq mask (dim=1); since the
    # fill value is 0, sequential masked_fill == single-pass OR of both masks.
    t_pos, t_len = sample_mask_params(k_t, B, T, time_mask_width)
    f_pos, f_len = sample_mask_params(k_f, B, F, freq_mask_width)
    params = jnp.stack([t_pos, t_len, f_pos, f_len], axis=1).astype(jnp.int32)  # (B, 4)
    return fbank_aug_pallas(x, params), params


def reference(x, params):
    """Pure-JAX reference of the masking semantics."""
    B, F, T = x.shape
    t_pos = params[:, 0][:, None, None]
    t_len = params[:, 1][:, None, None]
    f_pos = params[:, 2][:, None, None]
    f_len = params[:, 3][:, None, None]
    t_idx = jnp.arange(T)[None, None, :]
    f_idx = jnp.arange(F)[None, :, None]
    time_mask = (t_idx >= t_pos) & (t_idx < t_pos + t_len)
    freq_mask = (f_idx >= f_pos) & (f_idx < f_pos + f_len)
    mask = time_mask | freq_mask
    return jnp.where(mask, 0.0, x)


if __name__ == "__main__":
    key = jax.random.PRNGKey(0)
    k_x, k_mask = jax.random.split(key)

    # batch, mel bins, time frames (T deliberately not 128-aligned)
    B, F, T = 4, 80, 200
    x = jax.random.normal(k_x, (B, F, T), dtype=jnp.float32)

    out, params = fbank_aug(x, k_mask)
    out = jax.block_until_ready(out)
    assert out.shape == x.shape and out.dtype == x.dtype
    assert jnp.allclose(out, reference(x, params)), "mismatch vs reference"

    # second case: prime batch, small odd-ish shapes — exercises divisor logic
    B2, F2, T2 = 3, 40, 96
    x2 = jax.random.normal(jax.random.PRNGKey(1), (B2, F2, T2), dtype=jnp.float32)
    out2, params2 = fbank_aug(x2, jax.random.PRNGKey(2))
    out2 = jax.block_until_ready(out2)
    assert jnp.allclose(out2, reference(x2, params2)), "mismatch vs reference (2)"

    print("KERNEL_OK")
</pallas_src>

<mosaic_0001>
module attributes {stable_mosaic.version = 11 : i64} {
  func.func @fbank_aug_kernel(%arg0: i32, %arg1: i32, %arg2: memref<16xi32, #tpu.memory_space<smem>>, %arg3: memref<4x80x200xf32, #tpu.memory_space<vmem>>, %arg4: memref<4x80x200xf32, #tpu.memory_space<vmem>>) attributes {dimension_semantics = [#tpu.dimension_semantics<parallel>, #tpu.dimension_semantics<parallel>], iteration_bounds = array<i64: 1, 1>, scalar_prefetch = 1 : i64, scratch_operands = 0 : i64, tpu.core_type = #tpu.core_type<tc>, window_params = [{transform_indices = @transform_0, window_bounds = array<i64: 4, 80, 200>}, {transform_indices = @transform_1, window_bounds = array<i64: 4, 80, 200>}]} {
    %c4_i32 = arith.constant 4 : i32
    %0 = arith.muli %arg0, %c4_i32 : i32
    %c80_i32 = arith.constant 80 : i32
    %1 = arith.muli %arg1, %c80_i32 : i32
    %2 = tpu.iota {dimensions = array<i32: 1>} : vector<1x200xi32>
    %3 = tpu.iota {dimensions = array<i32: 0>} : vector<80x1xi32>
    %4 = vector.broadcast %1 : i32 to vector<80x1xi32>
    %5 = arith.addi %3, %4 : vector<80x1xi32>
    %cst = arith.constant 0.000000e+00 : f32
    %c0_i32 = arith.constant 0 : i32
    %6 = arith.addi %0, %c0_i32 : i32
    %c4_i32_0 = arith.constant 4 : i32
    %7 = arith.muli %6, %c4_i32_0 : i32
    %c0_i32_1 = arith.constant 0 : i32
    %8 = arith.addi %7, %c0_i32_1 : i32
    %9 = arith.index_cast %8 : i32 to index
    %10 = memref.load %arg2[%9] : memref<16xi32, #tpu.memory_space<smem>>
    %c1_i32 = arith.constant 1 : i32
    %11 = arith.addi %7, %c1_i32 : i32
    %12 = arith.index_cast %11 : i32 to index
    %13 = memref.load %arg2[%12] : memref<16xi32, #tpu.memory_space<smem>>
    %c2_i32 = arith.constant 2 : i32
    %14 = arith.addi %7, %c2_i32 : i32
    %15 = arith.index_cast %14 : i32 to index
    %16 = memref.load %arg2[%15] : memref<16xi32, #tpu.memory_space<smem>>
    %c3_i32 = arith.constant 3 : i32
    %17 = arith.addi %7, %c3_i32 : i32
    %18 = arith.index_cast %17 : i32 to index
    %19 = memref.load %arg2[%18] : memref<16xi32, #tpu.memory_space<smem>>
    %20 = vector.broadcast %10 : i32 to vector<1x200xi32>
    %21 = arith.cmpi sge, %2, %20 : vector<1x200xi32>
    %22 = arith.addi %10, %13 : i32
    %23 = vector.broadcast %22 : i32 to vector<1x200xi32>
    %24 = arith.cmpi slt, %2, %23 : vector<1x200xi32>
    %25 = arith.andi %21, %24 : vector<1x200xi1>
    %26 = vector.broadcast %16 : i32 to vector<80x1xi32>
    %27 = arith.cmpi sge, %5, %26 : vector<80x1xi32>
    %28 = arith.addi %16, %19 : i32
    %29 = vector.broadcast %28 : i32 to vector<80x1xi32>
    %30 = arith.cmpi slt, %5, %29 : vector<80x1xi32>
    %31 = arith.andi %27, %30 : vector<80x1xi1>
    %32 = vector.broadcast %25 : vector<1x200xi1> to vector<80x200xi1>
    %33 = vector.broadcast %31 : vector<80x1xi1> to vector<80x200xi1>
    %34 = arith.ori %32, %33 : vector<80x200xi1>
    %35 = arith.index_cast %c0_i32 : i32 to index
    %c0 = arith.constant 0 : index
    %c0_2 = arith.constant 0 : index
    %36 = vector.load %arg3[%35, %c0, %c0_2] : memref<4x80x200xf32, #tpu.memory_space<vmem>>, vector<1x80x200xf32>
    %37 = vector.shape_cast %36 : vector<1x80x200xf32> to vector<80x200xf32>
    %38 = vector.broadcast %cst : f32 to vector<80x200xf32>
    %39 = arith.select %34, %38, %37 : vector<80x200xi1>, vector<80x200xf32>
    %40 = arith.index_cast %c0_i32 : i32 to index
    %c0_3 = arith.constant 0 : index
    %c0_4 = arith.constant 0 : index
    %41 = vector.load %arg4[%40, %c0_3, %c0_4] : memref<4x80x200xf32, #tpu.memory_space<vmem>>, vector<1x80x200xf32>
    %42 = vector.shape_cast %41 : vector<1x80x200xf32> to vector<80x200xf32>
    %43 = vector.shape_cast %39 : vector<80x200xf32> to vector<1x80x200xf32>
    tpu.vector_store %arg4[%40, %c0_3, %c0_4], %43 {strides = array<i32>} : memref<4x80x200xf32, #tpu.memory_space<vmem>>, vector<1x80x200xf32>,
    %c1_i32_5 = arith.constant 1 : i32
    %44 = arith.addi %0, %c1_i32_5 : i32
    %c4_i32_6 = arith.constant 4 : i32
    %45 = arith.muli %44, %c4_i32_6 : i32
    %c0_i32_7 = arith.constant 0 : i32
    %46 = arith.addi %45, %c0_i32_7 : i32
    %47 = arith.index_cast %46 : i32 to index
    %48 = memref.load %arg2[%47] : memref<16xi32, #tpu.memory_space<smem>>
    %c1_i32_8 = arith.constant 1 : i32
    %49 = arith.addi %45, %c1_i32_8 : i32
    %50 = arith.index_cast %49 : i32 to index
    %51 = memref.load %arg2[%50] : memref<16xi32, #tpu.memory_space<smem>>
    %c2_i32_9 = arith.constant 2 : i32
    %52 = arith.addi %45, %c2_i32_9 : i32
    %53 = arith.index_cast %52 : i32 to index
    %54 = memref.load %arg2[%53] : memref<16xi32, #tpu.memory_space<smem>>
    %c3_i32_10 = arith.constant 3 : i32
    %55 = arith.addi %45, %c3_i32_10 : i32
    %56 = arith.index_cast %55 : i32 to index
    %57 = memref.load %arg2[%56] : memref<16xi32, #tpu.memory_space<smem>>
    %58 = vector.broadcast %48 : i32 to vector<1x200xi32>
    %59 = arith.cmpi sge, %2, %58 : vector<1x200xi32>
    %60 = arith.addi %48, %51 : i32
    %61 = vector.broadcast %60 : i32 to vector<1x200xi32>
    %62 = arith.cmpi slt, %2, %61 : vector<1x200xi32>
    %63 = arith.andi %59, %62 : vector<1x200xi1>
    %64 = vector.broadcast %54 : i32 to vector<80x1xi32>
    %65 = arith.cmpi sge, %5, %64 : vector<80x1xi32>
    %66 = arith.addi %54, %57 : i32
    %67 = vector.broadcast %66 : i32 to vector<80x1xi32>
    %68 = arith.cmpi slt, %5, %67 : vector<80x1xi32>
    %69 = arith.andi %65, %68 : vector<80x1xi1>
    %70 = vector.broadcast %63 : vector<1x200xi1> to vector<80x200xi1>
    %71 = vector.broadcast %69 : vector<80x1xi1> to vector<80x200xi1>
    %72 = arith.ori %70, %71 : vector<80x200xi1>
    %73 = arith.index_cast %c1_i32_5 : i32 to index
    %c0_11 = arith.constant 0 : index
    %c0_12 = arith.constant 0 : index
    %74 = vector.load %arg3[%73, %c0_11, %c0_12] : memref<4x80x200xf32, #tpu.memory_space<vmem>>, vector<1x80x200xf32>
    %75 = vector.shape_cast %74 : vector<1x80x200xf32> to vector<80x200xf32>
    %76 = vector.broadcast %cst : f32 to vector<80x200xf32>
    %77 = arith.select %72, %76, %75 : vector<80x200xi1>, vector<80x200xf32>
    %78 = arith.index_cast %c1_i32_5 : i32 to index
    %c0_13 = arith.constant 0 : index
    %c0_14 = arith.constant 0 : index
    %79 = vector.load %arg4[%78, %c0_13, %c0_14] : memref<4x80x200xf32, #tpu.memory_space<vmem>>, vector<1x80x200xf32>
    %80 = vector.shape_cast %79 : vector<1x80x200xf32> to vector<80x200xf32>
    %81 = vector.shape_cast %77 : vector<80x200xf32> to vector<1x80x200xf32>
    tpu.vector_store %arg4[%78, %c0_13, %c0_14], %81 {strides = array<i32>} : memref<4x80x200xf32, #tpu.memory_space<vmem>>, vector<1x80x200xf32>,
    %c2_i32_15 = arith.constant 2 : i32
    %82 = arith.addi %0, %c2_i32_15 : i32
    %c4_i32_16 = arith.constant 4 : i32
    %83 = arith.muli %82, %c4_i32_16 : i32
    %c0_i32_17 = arith.constant 0 : i32
    %84 = arith.addi %83, %c0_i32_17 : i32
    %85 = arith.index_cast %84 : i32 to index
    %86 = memref.load %arg2[%85] : memref<16xi32, #tpu.memory_space<smem>>
    %c1_i32_18 = arith.constant 1 : i32
    %87 = arith.addi %83, %c1_i32_18 : i32
    %88 = arith.index_cast %87 : i32 to index
    %89 = memref.load %arg2[%88] : memref<16xi32, #tpu.memory_space<smem>>
    %c2_i32_19 = arith.constant 2 : i32
    %90 = arith.addi %83, %c2_i32_19 : i32
    %91 = arith.index_cast %90 : i32 to index
    %92 = memref.load %arg2[%91] : memref<16xi32, #tpu.memory_space<smem>>
    %c3_i32_20 = arith.constant 3 : i32
    %93 = arith.addi %83, %c3_i32_20 : i32
    %94 = arith.index_cast %93 : i32 to index
    %95 = memref.load %arg2[%94] : memref<16xi32, #tpu.memory_space<smem>>
    %96 = vector.broadcast %86 : i32 to vector<1x200xi32>
    %97 = arith.cmpi sge, %2, %96 : vector<1x200xi32>
    %98 = arith.addi %86, %89 : i32
    %99 = vector.broadcast %98 : i32 to vector<1x200xi32>
    %100 = arith.cmpi slt, %2, %99 : vector<1x200xi32>
    %101 = arith.andi %97, %100 : vector<1x200xi1>
    %102 = vector.broadcast %92 : i32 to vector<80x1xi32>
    %103 = arith.cmpi sge, %5, %102 : vector<80x1xi32>
    %104 = arith.addi %92, %95 : i32
    %105 = vector.broadcast %104 : i32 to vector<80x1xi32>
    %106 = arith.cmpi slt, %5, %105 : vector<80x1xi32>
    %107 = arith.andi %103, %106 : vector<80x1xi1>
    %108 = vector.broadcast %101 : vector<1x200xi1> to vector<80x200xi1>
    %109 = vector.broadcast %107 : vector<80x1xi1> to vector<80x200xi1>
    %110 = arith.ori %108, %109 : vector<80x200xi1>
    %111 = arith.index_cast %c2_i32_15 : i32 to index
    %c0_21 = arith.constant 0 : index
    %c0_22 = arith.constant 0 : index
    %112 = vector.load %arg3[%111, %c0_21, %c0_22] : memref<4x80x200xf32, #tpu.memory_space<vmem>>, vector<1x80x200xf32>
    %113 = vector.shape_cast %112 : vector<1x80x200xf32> to vector<80x200xf32>
    %114 = vector.broadcast %cst : f32 to vector<80x200xf32>
    %115 = arith.select %110, %114, %113 : vector<80x200xi1>, vector<80x200xf32>
    %116 = arith.index_cast %c2_i32_15 : i32 to index
    %c0_23 = arith.constant 0 : index
    %c0_24 = arith.constant 0 : index
    %117 = vector.load %arg4[%116, %c0_23, %c0_24] : memref<4x80x200xf32, #tpu.memory_space<vmem>>, vector<1x80x200xf32>
    %118 = vector.shape_cast %117 : vector<1x80x200xf32> to vector<80x200xf32>
    %119 = vector.shape_cast %115 : vector<80x200xf32> to vector<1x80x200xf32>
    tpu.vector_store %arg4[%116, %c0_23, %c0_24], %119 {strides = array<i32>} : memref<4x80x200xf32, #tpu.memory_space<vmem>>, vector<1x80x200xf32>,
    %c3_i32_25 = arith.constant 3 : i32
    %120 = arith.addi %0, %c3_i32_25 : i32
    %c4_i32_26 = arith.constant 4 : i32
    %121 = arith.muli %120, %c4_i32_26 : i32
    %c0_i32_27 = arith.constant 0 : i32
    %122 = arith.addi %121, %c0_i32_27 : i32
    %123 = arith.index_cast %122 : i32 to index
    %124 = memref.load %arg2[%123] : memref<16xi32, #tpu.memory_space<smem>>
    %c1_i32_28 = arith.constant 1 : i32
    %125 = arith.addi %121, %c1_i32_28 : i32
    %126 = arith.index_cast %125 : i32 to index
    %127 = memref.load %arg2[%126] : memref<16xi32, #tpu.memory_space<smem>>
    %c2_i32_29 = arith.constant 2 : i32
    %128 = arith.addi %121, %c2_i32_29 : i32
    %129 = arith.index_cast %128 : i32 to index
    %130 = memref.load %arg2[%129] : memref<16xi32, #tpu.memory_space<smem>>
    %c3_i32_30 = arith.constant 3 : i32
    %131 = arith.addi %121, %c3_i32_30 : i32
    %132 = arith.index_cast %131 : i32 to index
    %133 = memref.load %arg2[%132] : memref<16xi32, #tpu.memory_space<smem>>
    %134 = vector.broadcast %124 : i32 to vector<1x200xi32>
    %135 = arith.cmpi sge, %2, %134 : vector<1x200xi32>
    %136 = arith.addi %124, %127 : i32
    %137 = vector.broadcast %136 : i32 to vector<1x200xi32>
    %138 = arith.cmpi slt, %2, %137 : vector<1x200xi32>
    %139 = arith.andi %135, %138 : vector<1x200xi1>
    %140 = vector.broadcast %130 : i32 to vector<80x1xi32>
    %141 = arith.cmpi sge, %5, %140 : vector<80x1xi32>
    %142 = arith.addi %130, %133 : i32
    %143 = vector.broadcast %142 : i32 to vector<80x1xi32>
    %144 = arith.cmpi slt, %5, %143 : vector<80x1xi32>
    %145 = arith.andi %141, %144 : vector<80x1xi1>
    %146 = vector.broadcast %139 : vector<1x200xi1> to vector<80x200xi1>
    %147 = vector.broadcast %145 : vector<80x1xi1> to vector<80x200xi1>
    %148 = arith.ori %146, %147 : vector<80x200xi1>
    %149 = arith.index_cast %c3_i32_25 : i32 to index
    %c0_31 = arith.constant 0 : index
    %c0_32 = arith.constant 0 : index
    %150 = vector.load %arg3[%149, %c0_31, %c0_32] : memref<4x80x200xf32, #tpu.memory_space<vmem>>, vector<1x80x200xf32>
    %151 = vector.shape_cast %150 : vector<1x80x200xf32> to vector<80x200xf32>
    %152 = vector.broadcast %cst : f32 to vector<80x200xf32>
    %153 = arith.select %148, %152, %151 : vector<80x200xi1>, vector<80x200xf32>
    %154 = arith.index_cast %c3_i32_25 : i32 to index
    %c0_33 = arith.constant 0 : index
    %c0_34 = arith.constant 0 : index
    %155 = vector.load %arg4[%154, %c0_33, %c0_34] : memref<4x80x200xf32, #tpu.memory_space<vmem>>, vector<1x80x200xf32>
    %156 = vector.shape_cast %155 : vector<1x80x200xf32> to vector<80x200xf32>
    %157 = vector.shape_cast %153 : vector<80x200xf32> to vector<1x80x200xf32>
    tpu.vector_store %arg4[%154, %c0_33, %c0_34], %157 {strides = array<i32>} : memref<4x80x200xf32, #tpu.memory_space<vmem>>, vector<1x80x200xf32>,
    %c4_i32_35 = arith.constant 4 : i32
    return
  }
  func.func @transform_0(%arg0: i32, %arg1: i32, %arg2: memref<16xi32, #tpu.memory_space<smem>>) -> (i32, i32, i32) {
    %c0_i32 = arith.constant 0 : i32
    %c0_i32_0 = arith.constant 0 : i32
    return %arg0, %arg1, %c0_i32 : i32, i32, i32
  }
  func.func @transform_1(%arg0: i32, %arg1: i32, %arg2: memref<16xi32, #tpu.memory_space<smem>>) -> (i32, i32, i32) {
    %c0_i32 = arith.constant 0 : i32
    %c0_i32_0 = arith.constant 0 : i32
    return %arg0, %arg1, %c0_i32 : i32, i32, i32
  }
}

</mosaic_0001>

<llo_original>
// kernel: tpu_custom_call.1
$region0: #{tpu_custom_call.1}
  #allocation0 [shape = 'u32[]', space=smem, size = 0x4, offset = 0x4, fixed_abs, tag = 'smem constant byte address 0x4 - core index']
  #allocation1 [shape = 'u32[72,128]{1,0:T(1,128)}', space=vmem, size = 0x9000, scoped, tag = 'internal scratch']
  #allocation2 [shape = 's32[1]{0}', space=sflag, size = 0x4, scoped, tag = 'scoped memory for tpu_custom_call.1']
  #allocation3 [shape = 'u8[512]{0}', space=smem, size = 0x200, scoped, tag = 'prefetched SMEM operand 0']
  %s0 = inlined_call_operand.hbm [shape: s32[16], index: 0, kind: input, shape index: {}]
  %s1 = inlined_call_operand.hbm [shape: f32[4,80,200], index: 1, kind: input, shape index: {}]
  %s2 = inlined_call_operand.hbm [shape: f32[4,80,200], index: 2, kind: output, shape index: {}]
  %s3 = sld [smem:[#allocation0]]
  $region18: #{tpu_custom_call.1} parent=0
    _
  %s5 = ssub.s32 1, %s3
  %s6 = scalar_select 0, %s5, %s3
  %s8 = sshll.u32 %s0, 4
  %s9 = int_to_ptr.hbm [resolvable:$true] %s8
  %11 = dma.hbm_to_smem %s9, 16, [#allocation3], [#allocation2]
  %13 = dma.done [#allocation2], 16
  %14 = sfence
  $region1: #{tpu_custom_call.1} parent=0
    #allocation4 [shape = 'u8[327680]{0}', space=vmem, size = 0x50000, scoped, tag = 'input window, operand 1, single buffered']
    #allocation5 [shape = 's32[1]{0}', space=sflag, size = 0x4, scoped, tag = 'scoped memory for tpu_custom_call.1']
    #allocation6 [shape = 's32[1]{0}', space=sflag, size = 0x4, scoped, tag = 'scoped memory for tpu_custom_call.1']
    #allocation7 [shape = 'u8[327680]{0}', space=vmem, size = 0x50000, scoped, tag = 'output window, operand 0, single buffered']
    %15 = vsyncpa [#allocation5], 0
    %16 = vsyncpa [#allocation6], 0
    // Predicated region
    $region2: #{tpu_custom_call.1} parent=1 // pred_check
      _
    $region3: #{tpu_custom_call.1} parent=1 // pred_check_branch
      %18 = sbr.rel (0) target = $region5
    $region4: #{tpu_custom_call.1} parent=1 // pred_region
      %20 = vsyncadd [#allocation5], 0
      %s21 = sshll.u32 %s1, 4
      %s22 = int_to_ptr.hbm [resolvable:$true] %s21
      %s23 = sshll.u32 [#allocation4], 4
      %s24 = int_to_ptr.vmem [resolvable:$true] %s23
      %29 = dma.hbm_to_vmem [thread:$0]  %s22, 10240, %s24, [#allocation5], 256, 256, 16
    $region5: #{tpu_custom_call.1} parent=1 // pred_fallthru
      _
    // Predicated region
    $region6: #{tpu_custom_call.1} parent=1 // pred_check
      _
    $region7: #{tpu_custom_call.1} parent=1 // pred_check_branch
      %31 = sbr.rel (0) target = $region9
    $region8: #{tpu_custom_call.1} parent=1 // pred_region
      %33 = dma.done [#allocation5], 10240
    $region9: #{tpu_custom_call.1} parent=1 // pred_fallthru
      _
    %s34 = smul.u32 0, 4
    %s35 = smul.u32 0, 80
    %v36 = vlaneseq
    %v37 = vand.u32 %v36, 127
    %v38 = vadd.s32 %v37, 128
    %v39 = vlaneseq
    %v40 = vshrl.u32 %v39, 7
    %v41 = vadd.s32 %v40, 8
    %v42 = vadd.s32 %v40, 16
    %v43 = vadd.s32 %v40, 24
    %v44 = vadd.s32 %v40, 32
    %v45 = vadd.s32 %v40, 40
    %v46 = vadd.s32 %v40, 48
    %v47 = vadd.s32 %v40, 56
    %v48 = vadd.s32 %v40, 64
    %v49 = vadd.s32 %v40, 72
    %v50 = vstv %s35
    %v51 = vadd.s32 %v40, %v50
    %v52 = vadd.s32 %v41, %v50
    %v53 = vadd.s32 %v42, %v50
    %v54 = vadd.s32 %v43, %v50
    %v55 = vadd.s32 %v44, %v50
    %v56 = vadd.s32 %v45, %v50
    %v57 = vadd.s32 %v46, %v50
    %v58 = vadd.s32 %v47, %v50
    %v59 = vadd.s32 %v48, %v50
    %v60 = vadd.s32 %v49, %v50
    %s61 = smul.u32 0, 16
    %s62 = sld [smem:[#allocation3 + %s61]]
    %s63 = sadd.s32 %s61, 1
    %s64 = sld [smem:[#allocation3 + %s63]]
    %s65 = sadd.s32 %s61, 2
    %s66 = sld [smem:[#allocation3 + %s65]]
    %s67 = sadd.s32 %s61, 3
    %s68 = sld [smem:[#allocation3 + %s67]]
    %v69 = vstv %s62
    %vm70 = vcmp.ge.s32.totalorder %v37, %v69
    %vm71 = vcmp.ge.s32.totalorder %v38, %v69
    %s72 = sadd.s32 %s62, %s64
    %v73 = vstv %s72
    %vm74 = vcmp.lt.s32.totalorder %v37, %v73
    %vm75 = vcmp.lt.s32.totalorder %v38, %v73
    %vm76 = vmand %vm70, %vm74
    %vm77 = vmand %vm71, %vm75
    %v78 = vstv %s66
    %vm79 = vcmp.ge.s32.totalorder %v51, %v78
    %vm80 = vcmp.ge.s32.totalorder %v52, %v78
    %vm81 = vcmp.ge.s32.totalorder %v53, %v78
    %vm82 = vcmp.ge.s32.totalorder %v54, %v78
    %vm83 = vcmp.ge.s32.totalorder %v55, %v78
    %vm84 = vcmp.ge.s32.totalorder %v56, %v78
    %vm85 = vcmp.ge.s32.totalorder %v57, %v78
    %vm86 = vcmp.ge.s32.totalorder %v58, %v78
    %vm87 = vcmp.ge.s32.totalorder %v59, %v78
    %vm88 = vcmp.ge.s32.totalorder %v60, %v78
    %s89 = sadd.s32 %s66, %s68
    %v90 = vstv %s89
    %vm91 = vcmp.lt.s32.totalorder %v51, %v90
    %vm92 = vcmp.lt.s32.totalorder %v52, %v90
    %vm93 = vcmp.lt.s32.totalorder %v53, %v90
    %vm94 = vcmp.lt.s32.totalorder %v54, %v90
    %vm95 = vcmp.lt.s32.totalorder %v55, %v90
    %vm96 = vcmp.lt.s32.totalorder %v56, %v90
    %vm97 = vcmp.lt.s32.totalorder %v57, %v90
    %vm98 = vcmp.lt.s32.totalorder %v58, %v90
    %vm99 = vcmp.lt.s32.totalorder %v59, %v90
    %vm100 = vcmp.lt.s32.totalorder %v60, %v90
    %vm101 = vmand %vm79, %vm91
    %vm102 = vmand %vm80, %vm92
    %vm103 = vmand %vm81, %vm93
    %vm104 = vmand %vm82, %vm94
    %vm105 = vmand %vm83, %vm95
    %vm106 = vmand %vm84, %vm96
    %vm107 = vmand %vm85, %vm97
    %vm108 = vmand %vm86, %vm98
    %vm109 = vmand %vm87, %vm99
    %vm110 = vmand %vm88, %vm100
    %v111 = vsel %vm76, 1, 0
    %v112 = vsel %vm77, 1, 0
    %vm113 = vcmp.eq.s32.totalorder %v111, 1
    %vm114 = vcmp.eq.s32.totalorder %v112, 1
    %v115 = vsel %vm101, 1, 0
    %v116 = vsel %vm102, 1, 0
    %v117 = vsel %vm103, 1, 0
    %v118 = vsel %vm104, 1, 0
    %v119 = vsel %vm105, 1, 0
    %v120 = vsel %vm106, 1, 0
    %v121 = vsel %vm107, 1, 0
    %v122 = vsel %vm108, 1, 0
    %v123 = vsel %vm109, 1, 0
    %v124 = vsel %vm110, 1, 0
    %vm125 = vcmp.eq.s32.totalorder %v115, 1
    %vm126 = vcmp.eq.s32.totalorder %v116, 1
    %vm127 = vcmp.eq.s32.totalorder %v117, 1
    %vm128 = vcmp.eq.s32.totalorder %v118, 1
    %vm129 = vcmp.eq.s32.totalorder %v119, 1
    %vm130 = vcmp.eq.s32.totalorder %v120, 1
    %vm131 = vcmp.eq.s32.totalorder %v121, 1
    %vm132 = vcmp.eq.s32.totalorder %v122, 1
    %vm133 = vcmp.eq.s32.totalorder %v123, 1
    %vm134 = vcmp.eq.s32.totalorder %v124, 1
    %vm135 = vmor %vm113, %vm125
    %vm136 = vmor %vm114, %vm125
    %vm137 = vmor %vm113, %vm126
    %vm138 = vmor %vm114, %vm126
    %vm139 = vmor %vm113, %vm127
    %vm140 = vmor %vm114, %vm127
    %vm141 = vmor %vm113, %vm128
    %vm142 = vmor %vm114, %vm128
    %vm143 = vmor %vm113, %vm129
    %vm144 = vmor %vm114, %vm129
    %vm145 = vmor %vm113, %vm130
    %vm146 = vmor %vm114, %vm130
    %vm147 = vmor %vm113, %vm131
    %vm148 = vmor %vm114, %vm131
    %vm149 = vmor %vm113, %vm132
    %vm150 = vmor %vm114, %vm132
    %vm151 = vmor %vm113, %vm133
    %vm152 = vmor %vm114, %vm133
    %vm153 = vmor %vm113, %vm134
    %vm154 = vmor %vm114, %vm134
    %v155 = vld [vmem:[#allocation4] sm:$0xff]
    %v156 = vld [vmem:[#allocation4 + $0x8] sm:$0xff]
    %v157 = vld [vmem:[#allocation4 + $0x10] sm:$0xff]
    %v158 = vld [vmem:[#allocation4 + $0x18] sm:$0xff]
    %v159 = vld [vmem:[#allocation4 + $0x20] sm:$0xff]
    %v160 = vld [vmem:[#allocation4 + $0x28] sm:$0xff]
    %v161 = vld [vmem:[#allocation4 + $0x30] sm:$0xff]
    %v162 = vld [vmem:[#allocation4 + $0x38] sm:$0xff]
    %v163 = vld [vmem:[#allocation4 + $0x40] sm:$0xff]
    %v164 = vld [vmem:[#allocation4 + $0x48] sm:$0xff]
    %v165 = vld [vmem:[#allocation4 + $0x50] sm:$0xff]
    %v166 = vld [vmem:[#allocation4 + $0x58] sm:$0xff]
    %v167 = vld [vmem:[#allocation4 + $0x60] sm:$0xff]
    %v168 = vld [vmem:[#allocation4 + $0x68] sm:$0xff]
    %v169 = vld [vmem:[#allocation4 + $0x70] sm:$0xff]
    %v170 = vld [vmem:[#allocation4 + $0x78] sm:$0xff]
    %v171 = vld [vmem:[#allocation4 + $0x80] sm:$0xff]
    %v172 = vld [vmem:[#allocation4 + $0x88] sm:$0xff]
    %v173 = vld [vmem:[#allocation4 + $0x90] sm:$0xff]
    %v174 = vld [vmem:[#allocation4 + $0x98] sm:$0xff]
    %v175 = vsel %vm135, 0.0, %v155
    %v176 = vsel %vm136, 0.0, %v156
    %v177 = vsel %vm137, 0.0, %v157
    %v178 = vsel %vm138, 0.0, %v158
    %v179 = vsel %vm139, 0.0, %v159
    %v180 = vsel %vm140, 0.0, %v160
    %v181 = vsel %vm141, 0.0, %v161
    %v182 = vsel %vm142, 0.0, %v162
    %v183 = vsel %vm143, 0.0, %v163
    %v184 = vsel %vm144, 0.0, %v164
    %v185 = vsel %vm145, 0.0, %v165
    %v186 = vsel %vm146, 0.0, %v166
    %v187 = vsel %vm147, 0.0, %v167
    %v188 = vsel %vm148, 0.0, %v168
    %v189 = vsel %vm149, 0.0, %v169
    %v190 = vsel %vm150, 0.0, %v170
    %v191 = vsel %vm151, 0.0, %v171
    %v192 = vsel %vm152, 0.0, %v172
    %v193 = vsel %vm153, 0.0, %v173
    %v194 = vsel %vm154, 0.0, %v174
    %195 = vst [vmem:[#allocation7] sm:$0xff] %v175
    %vm196 = vcmask 588800
    %197 = vst.msk [vmem:[#allocation7 + $0x8] sm:$0xff] %vm196, %v176
    %198 = vst [vmem:[#allocation7 + $0x10] sm:$0xff] %v177
    %199 = vst.msk [vmem:[#allocation7 + $0x18] sm:$0xff] %vm196, %v178
    %200 = vst [vmem:[#allocation7 + $0x20] sm:$0xff] %v179
    %201 = vst.msk [vmem:[#allocation7 + $0x28] sm:$0xff] %vm196, %v180
    %202 = vst [vmem:[#allocation7 + $0x30] sm:$0xff] %v181
    %203 = vst.msk [vmem:[#allocation7 + $0x38] sm:$0xff] %vm196, %v182
    %204 = vst [vmem:[#allocation7 + $0x40] sm:$0xff] %v183
    %205 = vst.msk [vmem:[#allocation7 + $0x48] sm:$0xff] %vm196, %v184
    %206 = vst [vmem:[#allocation7 + $0x50] sm:$0xff] %v185
    %207 = vst.msk [vmem:[#allocation7 + $0x58] sm:$0xff] %vm196, %v186
    %208 = vst [vmem:[#allocation7 + $0x60] sm:$0xff] %v187
    %209 = vst.msk [vmem:[#allocation7 + $0x68] sm:$0xff] %vm196, %v188
    %210 = vst [vmem:[#allocation7 + $0x70] sm:$0xff] %v189
    %211 = vst.msk [vmem:[#allocation7 + $0x78] sm:$0xff] %vm196, %v190
    %212 = vst [vmem:[#allocation7 + $0x80] sm:$0xff] %v191
    %213 = vst.msk [vmem:[#allocation7 + $0x88] sm:$0xff] %vm196, %v192
    %214 = vst [vmem:[#allocation7 + $0x90] sm:$0xff] %v193
    %215 = vst.msk [vmem:[#allocation7 + $0x98] sm:$0xff] %vm196, %v194
    %s216 = sadd.s32 %s34, 1
    %s217 = smul.u32 %s216, 4
    %s218 = sld [smem:[#allocation3 + %s217]]
    %s219 = sadd.s32 %s217, 1
    %s220 = sld [smem:[#allocation3 + %s219]]
    %s221 = sadd.s32 %s217, 2
    %s222 = sld [smem:[#allocation3 + %s221]]
    %s223 = sadd.s32 %s217, 3
    %s224 = sld [smem:[#allocation3 + %s223]]
    %v225 = vstv %s218
    %vm226 = vcmp.ge.s32.totalorder %v37, %v225
    %vm227 = vcmp.ge.s32.totalorder %v38, %v225
    %s228 = sadd.s32 %s218, %s220
    %v229 = vstv %s228
    %vm230 = vcmp.lt.s32.totalorder %v37, %v229
    %vm231 = vcmp.lt.s32.totalorder %v38, %v229
    %vm232 = vmand %vm226, %vm230
    %vm233 = vmand %vm227, %vm231
    %v234 = vstv %s222
    %vm235 = vcmp.ge.s32.totalorder %v51, %v234
    %vm236 = vcmp.ge.s32.totalorder %v52, %v234
    %vm237 = vcmp.ge.s32.totalorder %v53, %v234
    %vm238 = vcmp.ge.s32.totalorder %v54, %v234
    %vm239 = vcmp.ge.s32.totalorder %v55, %v234
    %vm240 = vcmp.ge.s32.totalorder %v56, %v234
    %vm241 = vcmp.ge.s32.totalorder %v57, %v234
    %vm242 = vcmp.ge.s32.totalorder %v58, %v234
    %vm243 = vcmp.ge.s32.totalorder %v59, %v234
    %vm244 = vcmp.ge.s32.totalorder %v60, %v234
    %s245 = sadd.s32 %s222, %s224
    %v246 = vstv %s245
    %vm247 = vcmp.lt.s32.totalorder %v51, %v246
    %vm248 = vcmp.lt.s32.totalorder %v52, %v246
    %vm249 = vcmp.lt.s32.totalorder %v53, %v246
    %vm250 = vcmp.lt.s32.totalorder %v54, %v246
    %vm251 = vcmp.lt.s32.totalorder %v55, %v246
    %vm252 = vcmp.lt.s32.totalorder %v56, %v246
    %vm253 = vcmp.lt.s32.totalorder %v57, %v246
    %vm254 = vcmp.lt.s32.totalorder %v58, %v246
    %vm255 = vcmp.lt.s32.totalorder %v59, %v246
    %vm256 = vcmp.lt.s32.totalorder %v60, %v246
    %vm257 = vmand %vm235, %vm247
    %vm258 = vmand %vm236, %vm248
    %vm259 = vmand %vm237, %vm249
    %vm260 = vmand %vm238, %vm250
    %vm261 = vmand %vm239, %vm251
    %vm262 = vmand %vm240, %vm252
    %vm263 = vmand %vm241, %vm253
    %vm264 = vmand %vm242, %vm254
    %vm265 = vmand %vm243, %vm255
    %vm266 = vmand %vm244, %vm256
    %v267 = vsel %vm232, 1, 0
    %v268 = vsel %vm233, 1, 0
    %vm269 = vcmp.eq.s32.totalorder %v267, 1
    %vm270 = vcmp.eq.s32.totalorder %v268, 1
    %v271 = vsel %vm257, 1, 0
    %v272 = vsel %vm258, 1, 0
    %v273 = vsel %vm259, 1, 0
    %v274 = vsel %vm260, 1, 0
    %v275 = vsel %vm261, 1, 0
    %v276 = vsel %vm262, 1, 0
    %v277 = vsel %vm263, 1, 0
    %v278 = vsel %vm264, 1, 0
    %v279 = vsel %vm265, 1, 0
    %v280 = vsel %vm266, 1, 0
    %vm281 = vcmp.eq.s32.totalorder %v271, 1
    %vm282 = vcmp.eq.s32.totalorder %v272, 1
    %vm283 = vcmp.eq.s32.totalorder %v273, 1
    %vm284 = vcmp.eq.s32.totalorder %v274, 1
    %vm285 = vcmp.eq.s32.totalorder %v275, 1
    %vm286 = vcmp.eq.s32.totalorder %v276, 1
    %vm287 = vcmp.eq.s32.totalorder %v277, 1
    %vm288 = vcmp.eq.s32.totalorder %v278, 1
    %vm289 = vcmp.eq.s32.totalorder %v279, 1
    %vm290 = vcmp.eq.s32.totalorder %v280, 1
    %vm291 = vmor %vm269, %vm281
    %vm292 = vmor %vm270, %vm281
    %vm293 = vmor %vm269, %vm282
    %vm294 = vmor %vm270, %vm282
    %vm295 = vmor %vm269, %vm283
    %vm296 = vmor %vm270, %vm283
    %vm297 = vmor %vm269, %vm284
    %vm298 = vmor %vm270, %vm284
    %vm299 = vmor %vm269, %vm285
    %vm300 = vmor %vm270, %vm285
    %vm301 = vmor %vm269, %vm286
    %vm302 = vmor %vm270, %vm286
    %vm303 = vmor %vm269, %vm287
    %vm304 = vmor %vm270, %vm287
    %vm305 = vmor %vm269, %vm288
    %vm306 = vmor %vm270, %vm288
    %vm307 = vmor %vm269, %vm289
    %vm308 = vmor %vm270, %vm289
    %vm309 = vmor %vm269, %vm290
    %vm310 = vmor %vm270, %vm290
    %s311 = scalar_lea.vmem [#allocation4], 160
    %v312 = vld [vmem:[%s311] sm:$0xff]
    %v313 = vld [vmem:[%s311 + $0x8] sm:$0xff]
    %v314 = vld [vmem:[%s311 + $0x10] sm:$0xff]
    %v315 = vld [vmem:[%s311 + $0x18] sm:$0xff]
    %v316 = vld [vmem:[%s311 + $0x20] sm:$0xff]
    %v317 = vld [vmem:[%s311 + $0x28] sm:$0xff]
    %v318 = vld [vmem:[%s311 + $0x30] sm:$0xff]
    %v319 = vld [vmem:[%s311 + $0x38] sm:$0xff]
    %v320 = vld [vmem:[%s311 + $0x40] sm:$0xff]
    %v321 = vld [vmem:[%s311 + $0x48] sm:$0xff]
    %v322 = vld [vmem:[%s311 + $0x50] sm:$0xff]
    %v323 = vld [vmem:[%s311 + $0x58] sm:$0xff]
    %v324 = vld [vmem:[%s311 + $0x60] sm:$0xff]
    %v325 = vld [vmem:[%s311 + $0x68] sm:$0xff]
    %v326 = vld [vmem:[%s311 + $0x70] sm:$0xff]
    %v327 = vld [vmem:[%s311 + $0x78] sm:$0xff]
    %v328 = vld [vmem:[%s311 + $0x80] sm:$0xff]
    %v329 = vld [vmem:[%s311 + $0x88] sm:$0xff]
    %v330 = vld [vmem:[%s311 + $0x90] sm:$0xff]
    %v331 = vld [vmem:[%s311 + $0x98] sm:$0xff]
    %v332 = vsel %vm291, 0.0, %v312
    %v333 = vsel %vm292, 0.0, %v313
    %v334 = vsel %vm293, 0.0, %v314
    %v335 = vsel %vm294, 0.0, %v315
    %v336 = vsel %vm295, 0.0, %v316
    %v337 = vsel %vm296, 0.0, %v317
    %v338 = vsel %vm297, 0.0, %v318
    %v339 = vsel %vm298, 0.0, %v319
    %v340 = vsel %vm299, 0.0, %v320
    %v341 = vsel %vm300, 0.0, %v321
    %v342 = vsel %vm301, 0.0, %v322
    %v343 = vsel %vm302, 0.0, %v323
    %v344 = vsel %vm303, 0.0, %v324
    %v345 = vsel %vm304, 0.0, %v325
    %v346 = vsel %vm305, 0.0, %v326
    %v347 = vsel %vm306, 0.0, %v327
    %v348 = vsel %vm307, 0.0, %v328
    %v349 = vsel %vm308, 0.0, %v329
    %v350 = vsel %vm309, 0.0, %v330
    %v351 = vsel %vm310, 0.0, %v331
    %s352 = scalar_lea.vmem [#allocation7], 160
    %353 = vst [vmem:[%s352] sm:$0xff] %v332
    %354 = vst.msk [vmem:[%s352 + $0x8] sm:$0xff] %vm196, %v333
    %355 = vst [vmem:[%s352 + $0x10] sm:$0xff] %v334
    %356 = vst.msk [vmem:[%s352 + $0x18] sm:$0xff] %vm196, %v335
    %357 = vst [vmem:[%s352 + $0x20] sm:$0xff] %v336
    %358 = vst.msk [vmem:[%s352 + $0x28] sm:$0xff] %vm196, %v337
    %359 = vst [vmem:[%s352 + $0x30] sm:$0xff] %v338
    %360 = vst.msk [vmem:[%s352 + $0x38] sm:$0xff] %vm196, %v339
    %361 = vst [vmem:[%s352 + $0x40] sm:$0xff] %v340
    %362 = vst.msk [vmem:[%s352 + $0x48] sm:$0xff] %vm196, %v341
    %363 = vst [vmem:[%s352 + $0x50] sm:$0xff] %v342
    %364 = vst.msk [vmem:[%s352 + $0x58] sm:$0xff] %vm196, %v343
    %365 = vst [vmem:[%s352 + $0x60] sm:$0xff] %v344
    %366 = vst.msk [vmem:[%s352 + $0x68] sm:$0xff] %vm196, %v345
    %367 = vst [vmem:[%s352 + $0x70] sm:$0xff] %v346
    %368 = vst.msk [vmem:[%s352 + $0x78] sm:$0xff] %vm196, %v347
    %369 = vst [vmem:[%s352 + $0x80] sm:$0xff] %v348
    %370 = vst.msk [vmem:[%s352 + $0x88] sm:$0xff] %vm196, %v349
    %371 = vst [vmem:[%s352 + $0x90] sm:$0xff] %v350
    %372 = vst.msk [vmem:[%s352 + $0x98] sm:$0xff] %vm196, %v351
    %s373 = sadd.s32 %s34, 2
    %s374 = smul.u32 %s373, 4
    %s375 = sld [smem:[#allocation3 + %s374]]
    %s376 = sadd.s32 %s374, 1
    %s377 = sld [smem:[#allocation3 + %s376]]
    %s378 = sadd.s32 %s374, 2
    %s379 = sld [smem:[#allocation3 + %s378]]
    %s380 = sadd.s32 %s374, 3
    %s381 = sld [smem:[#allocation3 + %s380]]
    %v382 = vstv %s375
    %vm383 = vcmp.ge.s32.totalorder %v37, %v382
    %vm384 = vcmp.ge.s32.totalorder %v38, %v382
    %s385 = sadd.s32 %s375, %s377
    %v386 = vstv %s385
    %vm387 = vcmp.lt.s32.totalorder %v37, %v386
    %vm388 = vcmp.lt.s32.totalorder %v38, %v386
    %vm389 = vmand %vm383, %vm387
    %vm390 = vmand %vm384, %vm388
    %v391 = vstv %s379
    %vm392 = vcmp.ge.s32.totalorder %v51, %v391
    %vm393 = vcmp.ge.s32.totalorder %v52, %v391
    %vm394 = vcmp.ge.s32.totalorder %v53, %v391
    %vm395 = vcmp.ge.s32.totalorder %v54, %v391
    %vm396 = vcmp.ge.s32.totalorder %v55, %v391
    %vm397 = vcmp.ge.s32.totalorder %v56, %v391
    %vm398 = vcmp.ge.s32.totalorder %v57, %v391
    %vm399 = vcmp.ge.s32.totalorder %v58, %v391
    %vm400 = vcmp.ge.s32.totalorder %v59, %v391
    %vm401 = vcmp.ge.s32.totalorder %v60, %v391
    %s402 = sadd.s32 %s379, %s381
    %v403 = vstv %s402
    %vm404 = vcmp.lt.s32.totalorder %v51, %v403
    %vm405 = vcmp.lt.s32.totalorder %v52, %v403
    %vm406 = vcmp.lt.s32.totalorder %v53, %v403
    %vm407 = vcmp.lt.s32.totalorder %v54, %v403
    %vm408 = vcmp.lt.s32.totalorder %v55, %v403
    %vm409 = vcmp.lt.s32.totalorder %v56, %v403
    %vm410 = vcmp.lt.s32.totalorder %v57, %v403
    %vm411 = vcmp.lt.s32.totalorder %v58, %v403
    %vm412 = vcmp.lt.s32.totalorder %v59, %v403
    %vm413 = vcmp.lt.s32.totalorder %v60, %v403
    %vm414 = vmand %vm392, %vm404
    %vm415 = vmand %vm393, %vm405
    %vm416 = vmand %vm394, %vm406
    %vm417 = vmand %vm395, %vm407
    %vm418 = vmand %vm396, %vm408
    %vm419 = vmand %vm397, %vm409
    %vm420 = vmand %vm398, %vm410
    %vm421 = vmand %vm399, %vm411
    %vm422 = vmand %vm400, %vm412
    %vm423 = vmand %vm401, %vm413
    %v424 = vsel %vm389, 1, 0
    %v425 = vsel %vm390, 1, 0
    %vm426 = vcmp.eq.s32.totalorder %v424, 1
    %vm427 = vcmp.eq.s32.totalorder %v425, 1
    %v428 = vsel %vm414, 1, 0
    %v429 = vsel %vm415, 1, 0
    %v430 = vsel %vm416, 1, 0
    %v431 = vsel %vm417, 1, 0
    %v432 = vsel %vm418, 1, 0
    %v433 = vsel %vm419, 1, 0
    %v434 = vsel %vm420, 1, 0
    %v435 = vsel %vm421, 1, 0
    %v436 = vsel %vm422, 1, 0
    %v437 = vsel %vm423, 1, 0
    %vm438 = vcmp.eq.s32.totalorder %v428, 1
    %vm439 = vcmp.eq.s32.totalorder %v429, 1
    %vm440 = vcmp.eq.s32.totalorder %v430, 1
    %vm441 = vcmp.eq.s32.totalorder %v431, 1
    %vm442 = vcmp.eq.s32.totalorder %v432, 1
    %vm443 = vcmp.eq.s32.totalorder %v433, 1
    %vm444 = vcmp.eq.s32.totalorder %v434, 1
    %vm445 = vcmp.eq.s32.totalorder %v435, 1
    %vm446 = vcmp.eq.s32.totalorder %v436, 1
    %vm447 = vcmp.eq.s32.totalorder %v437, 1
    %vm448 = vmor %vm426, %vm438
    %vm449 = vmor %vm427, %vm438
    %vm450 = vmor %vm426, %vm439
    %vm451 = vmor %vm427, %vm439
    %vm452 = vmor %vm426, %vm440
    %vm453 = vmor %vm427, %vm440
    %vm454 = vmor %vm426, %vm441
    %vm455 = vmor %vm427, %vm441
    %vm456 = vmor %vm426, %vm442
    %vm457 = vmor %vm427, %vm442
    %vm458 = vmor %vm426, %vm443
    %vm459 = vmor %vm427, %vm443
    %vm460 = vmor %vm426, %vm444
    %vm461 = vmor %vm427, %vm444
    %vm462 = vmor %vm426, %vm445
    %vm463 = vmor %vm427, %vm445
    %vm464 = vmor %vm426, %vm446
    %vm465 = vmor %vm427, %vm446
    %vm466 = vmor %vm426, %vm447
    %vm467 = vmor %vm427, %vm447
    %s468 = scalar_lea.vmem [#allocation4], 320
    %v469 = vld [vmem:[%s468] sm:$0xff]
    %v470 = vld [vmem:[%s468 + $0x8] sm:$0xff]
    %v471 = vld [vmem:[%s468 + $0x10] sm:$0xff]
    %v472 = vld [vmem:[%s468 + $0x18] sm:$0xff]
    %v473 = vld [vmem:[%s468 + $0x20] sm:$0xff]
    %v474 = vld [vmem:[%s468 + $0x28] sm:$0xff]
    %v475 = vld [vmem:[%s468 + $0x30] sm:$0xff]
    %v476 = vld [vmem:[%s468 + $0x38] sm:$0xff]
    %v477 = vld [vmem:[%s468 + $0x40] sm:$0xff]
    %v478 = vld [vmem:[%s468 + $0x48] sm:$0xff]
    %v479 = vld [vmem:[%s468 + $0x50] sm:$0xff]
    %v480 = vld [vmem:[%s468 + $0x58] sm:$0xff]
    %v481 = vld [vmem:[%s468 + $0x60] sm:$0xff]
    %v482 = vld [vmem:[%s468 + $0x68] sm:$0xff]
    %v483 = vld [vmem:[%s468 + $0x70] sm:$0xff]
    %v484 = vld [vmem:[%s468 + $0x78] sm:$0xff]
    %v485 = vld [vmem:[%s468 + $0x80] sm:$0xff]
    %v486 = vld [vmem:[%s468 + $0x88] sm:$0xff]
    %v487 = vld [vmem:[%s468 + $0x90] sm:$0xff]
    %v488 = vld [vmem:[%s468 + $0x98] sm:$0xff]
    %v489 = vsel %vm448, 0.0, %v469
    %v490 = vsel %vm449, 0.0, %v470
    %v491 = vsel %vm450, 0.0, %v471
    %v492 = vsel %vm451, 0.0, %v472
    %v493 = vsel %vm452, 0.0, %v473
    %v494 = vsel %vm453, 0.0, %v474
    %v495 = vsel %vm454, 0.0, %v475
    %v496 = vsel %vm455, 0.0, %v476
    %v497 = vsel %vm456, 0.0, %v477
    %v498 = vsel %vm457, 0.0, %v478
    %v499 = vsel %vm458, 0.0, %v479
    %v500 = vsel %vm459, 0.0, %v480
    %v501 = vsel %vm460, 0.0, %v481
    %v502 = vsel %vm461, 0.0, %v482
    %v503 = vsel %vm462, 0.0, %v483
    %v504 = vsel %vm463, 0.0, %v484
    %v505 = vsel %vm464, 0.0, %v485
    %v506 = vsel %vm465, 0.0, %v486
    %v507 = vsel %vm466, 0.0, %v487
    %v508 = vsel %vm467, 0.0, %v488
    %s509 = scalar_lea.vmem [#allocation7], 320
    %510 = vst [vmem:[%s509] sm:$0xff] %v489
    %511 = vst.msk [vmem:[%s509 + $0x8] sm:$0xff] %vm196, %v490
    %512 = vst [vmem:[%s509 + $0x10] sm:$0xff] %v491
    %513 = vst.msk [vmem:[%s509 + $0x18] sm:$0xff] %vm196, %v492
    %514 = vst [vmem:[%s509 + $0x20] sm:$0xff] %v493
    %515 = vst.msk [vmem:[%s509 + $0x28] sm:$0xff] %vm196, %v494
    %516 = vst [vmem:[%s509 + $0x30] sm:$0xff] %v495
    %517 = vst.msk [vmem:[%s509 + $0x38] sm:$0xff] %vm196, %v496
    %518 = vst [vmem:[%s509 + $0x40] sm:$0xff] %v497
    %519 = vst.msk [vmem:[%s509 + $0x48] sm:$0xff] %vm196, %v498
    %520 = vst [vmem:[%s509 + $0x50] sm:$0xff] %v499
    %521 = vst.msk [vmem:[%s509 + $0x58] sm:$0xff] %vm196, %v500
    %522 = vst [vmem:[%s509 + $0x60] sm:$0xff] %v501
    %523 = vst.msk [vmem:[%s509 + $0x68] sm:$0xff] %vm196, %v502
    %524 = vst [vmem:[%s509 + $0x70] sm:$0xff] %v503
    %525 = vst.msk [vmem:[%s509 + $0x78] sm:$0xff] %vm196, %v504
    %526 = vst [vmem:[%s509 + $0x80] sm:$0xff] %v505
    %527 = vst.msk [vmem:[%s509 + $0x88] sm:$0xff] %vm196, %v506
    %528 = vst [vmem:[%s509 + $0x90] sm:$0xff] %v507
    %529 = vst.msk [vmem:[%s509 + $0x98] sm:$0xff] %vm196, %v508
    %s530 = sadd.s32 %s34, 3
    %s531 = smul.u32 %s530, 4
    %s532 = sld [smem:[#allocation3 + %s531]]
    %s533 = sadd.s32 %s531, 1
    %s534 = sld [smem:[#allocation3 + %s533]]
    %s535 = sadd.s32 %s531, 2
    %s536 = sld [smem:[#allocation3 + %s535]]
    %s537 = sadd.s32 %s531, 3
    %s538 = sld [smem:[#allocation3 + %s537]]
    %v539 = vstv %s532
    %vm540 = vcmp.ge.s32.totalorder %v37, %v539
    %vm541 = vcmp.ge.s32.totalorder %v38, %v539
    %s542 = sadd.s32 %s532, %s534
    %v543 = vstv %s542
    %vm544 = vcmp.lt.s32.totalorder %v37, %v543
    %vm545 = vcmp.lt.s32.totalorder %v38, %v543
    %vm546 = vmand %vm540, %vm544
    %vm547 = vmand %vm541, %vm545
    %v548 = vstv %s536
    %vm549 = vcmp.ge.s32.totalorder %v51, %v548
    %vm550 = vcmp.ge.s32.totalorder %v52, %v548
    %vm551 = vcmp.ge.s32.totalorder %v53, %v548
    %vm552 = vcmp.ge.s32.totalorder %v54, %v548
    %vm553 = vcmp.ge.s32.totalorder %v55, %v548
    %vm554 = vcmp.ge.s32.totalorder %v56, %v548
    %vm555 = vcmp.ge.s32.totalorder %v57, %v548
    %vm556 = vcmp.ge.s32.totalorder %v58, %v548
    %vm557 = vcmp.ge.s32.totalorder %v59, %v548
    %vm558 = vcmp.ge.s32.totalorder %v60, %v548
    %s559 = sadd.s32 %s536, %s538
    %v560 = vstv %s559
    %vm561 = vcmp.lt.s32.totalorder %v51, %v560
    %vm562 = vcmp.lt.s32.totalorder %v52, %v560
    %vm563 = vcmp.lt.s32.totalorder %v53, %v560
    %vm564 = vcmp.lt.s32.totalorder %v54, %v560
    %vm565 = vcmp.lt.s32.totalorder %v55, %v560
    %vm566 = vcmp.lt.s32.totalorder %v56, %v560
    %vm567 = vcmp.lt.s32.totalorder %v57, %v560
    %vm568 = vcmp.lt.s32.totalorder %v58, %v560
    %vm569 = vcmp.lt.s32.totalorder %v59, %v560
    %vm570 = vcmp.lt.s32.totalorder %v60, %v560
    %vm571 = vmand %vm549, %vm561
    %vm572 = vmand %vm550, %vm562
    %vm573 = vmand %vm551, %vm563
    %vm574 = vmand %vm552, %vm564
    %vm575 = vmand %vm553, %vm565
    %vm576 = vmand %vm554, %vm566
    %vm577 = vmand %vm555, %vm567
    %vm578 = vmand %vm556, %vm568
    %vm579 = vmand %vm557, %vm569
    %vm580 = vmand %vm558, %vm570
    %v581 = vsel %vm546, 1, 0
    %v582 = vsel %vm547, 1, 0
    %vm583 = vcmp.eq.s32.totalorder %v581, 1
    %vm584 = vcmp.eq.s32.totalorder %v582, 1
    %v585 = vsel %vm571, 1, 0
    %v586 = vsel %vm572, 1, 0
    %v587 = vsel %vm573, 1, 0
    %v588 = vsel %vm574, 1, 0
    %v589 = vsel %vm575, 1, 0
    %v590 = vsel %vm576, 1, 0
    %v591 = vsel %vm577, 1, 0
    %v592 = vsel %vm578, 1, 0
    %v593 = vsel %vm579, 1, 0
    %v594 = vsel %vm580, 1, 0
    %vm595 = vcmp.eq.s32.totalorder %v585, 1
    %vm596 = vcmp.eq.s32.totalorder %v586, 1
    %vm597 = vcmp.eq.s32.totalorder %v587, 1
    %vm598 = vcmp.eq.s32.totalorder %v588, 1
    %vm599 = vcmp.eq.s32.totalorder %v589, 1
    %vm600 = vcmp.eq.s32.totalorder %v590, 1
    %vm601 = vcmp.eq.s32.totalorder %v591, 1
    %vm602 = vcmp.eq.s32.totalorder %v592, 1
    %vm603 = vcmp.eq.s32.totalorder %v593, 1
    %vm604 = vcmp.eq.s32.totalorder %v594, 1
    %vm605 = vmor %vm583, %vm595
    %vm606 = vmor %vm584, %vm595
    %vm607 = vmor %vm583, %vm596
    %vm608 = vmor %vm584, %vm596
    %vm609 = vmor %vm583, %vm597
    %vm610 = vmor %vm584, %vm597
    %vm611 = vmor %vm583, %vm598
    %vm612 = vmor %vm584, %vm598
    %vm613 = vmor %vm583, %vm599
    %vm614 = vmor %vm584, %vm599
    %vm615 = vmor %vm583, %vm600
    %vm616 = vmor %vm584, %vm600
    %vm617 = vmor %vm583, %vm601
    %vm618 = vmor %vm584, %vm601
    %vm619 = vmor %vm583, %vm602
    %vm620 = vmor %vm584, %vm602
    %vm621 = vmor %vm583, %vm603
    %vm622 = vmor %vm584, %vm603
    %vm623 = vmor %vm583, %vm604
    %vm624 = vmor %vm584, %vm604
    %s625 = scalar_lea.vmem [#allocation4], 480
    %v626 = vld [vmem:[%s625] sm:$0xff]
    %v627 = vld [vmem:[%s625 + $0x8] sm:$0xff]
    %v628 = vld [vmem:[%s625 + $0x10] sm:$0xff]
    %v629 = vld [vmem:[%s625 + $0x18] sm:$0xff]
    %v630 = vld [vmem:[%s625 + $0x20] sm:$0xff]
    %v631 = vld [vmem:[%s625 + $0x28] sm:$0xff]
    %v632 = vld [vmem:[%s625 + $0x30] sm:$0xff]
    %v633 = vld [vmem:[%s625 + $0x38] sm:$0xff]
    %v634 = vld [vmem:[%s625 + $0x40] sm:$0xff]
    %v635 = vld [vmem:[%s625 + $0x48] sm:$0xff]
    %v636 = vld [vmem:[%s625 + $0x50] sm:$0xff]
    %v637 = vld [vmem:[%s625 + $0x58] sm:$0xff]
    %v638 = vld [vmem:[%s625 + $0x60] sm:$0xff]
    %v639 = vld [vmem:[%s625 + $0x68] sm:$0xff]
    %v640 = vld [vmem:[%s625 + $0x70] sm:$0xff]
    %v641 = vld [vmem:[%s625 + $0x78] sm:$0xff]
    %v642 = vld [vmem:[%s625 + $0x80] sm:$0xff]
    %v643 = vld [vmem:[%s625 + $0x88] sm:$0xff]
    %v644 = vld [vmem:[%s625 + $0x90] sm:$0xff]
    %v645 = vld [vmem:[%s625 + $0x98] sm:$0xff]
    %v646 = vsel %vm605, 0.0, %v626
    %v647 = vsel %vm606, 0.0, %v627
    %v648 = vsel %vm607, 0.0, %v628
    %v649 = vsel %vm608, 0.0, %v629
    %v650 = vsel %vm609, 0.0, %v630
    %v651 = vsel %vm610, 0.0, %v631
    %v652 = vsel %vm611, 0.0, %v632
    %v653 = vsel %vm612, 0.0, %v633
    %v654 = vsel %vm613, 0.0, %v634
    %v655 = vsel %vm614, 0.0, %v635
    %v656 = vsel %vm615, 0.0, %v636
    %v657 = vsel %vm616, 0.0, %v637
    %v658 = vsel %vm617, 0.0, %v638
    %v659 = vsel %vm618, 0.0, %v639
    %v660 = vsel %vm619, 0.0, %v640
    %v661 = vsel %vm620, 0.0, %v641
    %v662 = vsel %vm621, 0.0, %v642
    %v663 = vsel %vm622, 0.0, %v643
    %v664 = vsel %vm623, 0.0, %v644
    %v665 = vsel %vm624, 0.0, %v645
    %s666 = scalar_lea.vmem [#allocation7], 480
    %667 = vst [vmem:[%s666] sm:$0xff] %v646
    %668 = vst.msk [vmem:[%s666 + $0x8] sm:$0xff] %vm196, %v647
    %669 = vst [vmem:[%s666 + $0x10] sm:$0xff] %v648
    %670 = vst.msk [vmem:[%s666 + $0x18] sm:$0xff] %vm196, %v649
    %671 = vst [vmem:[%s666 + $0x20] sm:$0xff] %v650
    %672 = vst.msk [vmem:[%s666 + $0x28] sm:$0xff] %vm196, %v651
    %673 = vst [vmem:[%s666 + $0x30] sm:$0xff] %v652
    %674 = vst.msk [vmem:[%s666 + $0x38] sm:$0xff] %vm196, %v653
    %675 = vst [vmem:[%s666 + $0x40] sm:$0xff] %v654
    %676 = vst.msk [vmem:[%s666 + $0x48] sm:$0xff] %vm196, %v655
    %677 = vst [vmem:[%s666 + $0x50] sm:$0xff] %v656
    %678 = vst.msk [vmem:[%s666 + $0x58] sm:$0xff] %vm196, %v657
    %679 = vst [vmem:[%s666 + $0x60] sm:$0xff] %v658
    %680 = vst.msk [vmem:[%s666 + $0x68] sm:$0xff] %vm196, %v659
    %681 = vst [vmem:[%s666 + $0x70] sm:$0xff] %v660
    %682 = vst.msk [vmem:[%s666 + $0x78] sm:$0xff] %vm196, %v661
    %683 = vst [vmem:[%s666 + $0x80] sm:$0xff] %v662
    %684 = vst.msk [vmem:[%s666 + $0x88] sm:$0xff] %vm196, %v663
    %685 = vst [vmem:[%s666 + $0x90] sm:$0xff] %v664
    %686 = vst.msk [vmem:[%s666 + $0x98] sm:$0xff] %vm196, %v665
    // Predicated region
    $region10: #{tpu_custom_call.1} parent=1 // pred_check
      _
    $region11: #{tpu_custom_call.1} parent=1 // pred_check_branch
      %688 = sbr.rel (0) target = $region13
    $region12: #{tpu_custom_call.1} parent=1 // pred_region
      %690 = vsyncadd [#allocation6], 0
      %s691 = sshll.u32 [#allocation7], 4
      %s692 = int_to_ptr.vmem [resolvable:$true] %s691
      %s693 = sshll.u32 %s2, 4
      %s694 = int_to_ptr.hbm [resolvable:$true] %s693
      %699 = dma.vmem_to_hbm [thread:$0]  %s692, 10240, %s694, [#allocation6], 256, 256, 16
    $region13: #{tpu_custom_call.1} parent=1 // pred_fallthru
      _
    // Predicated region
    $region14: #{tpu_custom_call.1} parent=1 // pred_check
      _
    $region15: #{tpu_custom_call.1} parent=1 // pred_check_branch
      %701 = sbr.rel (0) target = $region17
    $region16: #{tpu_custom_call.1} parent=1 // pred_region
      %703 = dma.done [#allocation6], 10240
    $region17: #{tpu_custom_call.1} parent=1 // pred_fallthru
      _
    %704 = vsyncpa [#allocation5], 1
    %705 = vsyncpa [#allocation6], 1

</llo_original>
